<compile_context>
chip_gen: v7x
topology: tpu7x:2x2x1
jax: 0.10.0
libtpu: 0.0.40
codegen_flags: <defaults>
</compile_context>

<pallas_src>
import math

import numpy as np
import jax
import jax.numpy as jnp
from jax import lax
from jax.experimental import pallas as pl
from jax.experimental.pallas import tpu as pltpu

# Small, module-consistent sizes (original: d_model=512, max_seq_len=128, vocab=128)
D_MODEL = 128
MAX_SEQ_LEN = 16
VOCAB_SIZE = 32


def get_pos_embedding(max_seq_len=MAX_SEQ_LEN, d_model=D_MODEL) -> np.ndarray:
    """Exact reproduction of InputEmbedding.get_pos_embedding (incl. the /14 quirk)."""
    x = np.zeros((max_seq_len, d_model), dtype=np.float32)
    for i in range(max_seq_len):
        for j in range(0, d_model, 2):
            x[i, j] = math.sin(i / 10000 ** (2 * j / 14))
            x[i, j + 1] = math.cos(i / 10000 ** (2 * j / 14))
    return x


def _input_embedding_kernel(ids_ref, table_ref, pos_ref, out_ref):
    # ids_ref  : VMEM (S, 1) int32 -- token ids for this batch row
    # table_ref: VMEM (V, D) f32   -- whole embedding table, grid-invariant
    # pos_ref  : VMEM (S, D) f32   -- positional table, grid-invariant
    # out_ref  : VMEM (S, D) f32   -- one batch row of the output
    S = out_ref.shape[0]
    V = table_ref.shape[0]

    ids = ids_ref[...]                                              # (S, 1)
    vocab_iota = lax.broadcasted_iota(jnp.int32, (S, V), dimension=1)
    one_hot = (ids == vocab_iota).astype(table_ref.dtype)           # (S, V)

    # In-VMEM gather as a one-hot matmul on the MXU, fused with the pos add.
    emb = jnp.dot(one_hot, table_ref[...], preferred_element_type=jnp.float32)
    out_ref[...] = (emb + pos_ref[...]).astype(out_ref.dtype)


def input_embedding(ids, table, pos):
    """ids: (B, S) int, table: (V, D) f32, pos: (S, D) f32 -> (B, S, D) f32."""
    B, S = ids.shape
    V, D = table.shape
    assert pos.shape == (S, D), "seq len must equal max_seq_len (PyTorch broadcast)"

    # (B, S, 1) puts S on sublanes -> natural layout for the one-hot compare.
    ids3 = ids.astype(jnp.int32).reshape(B, S, 1)

    grid_spec = pltpu.PrefetchScalarGridSpec(
        num_scalar_prefetch=0,
        grid=(B,),
        in_specs=[
            pl.BlockSpec((None, S, 1), lambda b: (b, 0, 0)),   # token ids (per batch)
            pl.BlockSpec((V, D), lambda b: (0, 0)),            # table, VMEM-resident
            pl.BlockSpec((S, D), lambda b: (0, 0)),            # pos, grid-invariant
        ],
        out_specs=pl.BlockSpec((None, S, D), lambda b: (b, 0, 0)),
    )

    return pl.pallas_call(
        _input_embedding_kernel,
        out_shape=jax.ShapeDtypeStruct((B, S, D), jnp.float32),
        grid_spec=grid_spec,
        compiler_params=pltpu.CompilerParams(
            dimension_semantics=("parallel",)),   # v7x: 2 TCs split the batch
    )(ids3, table, pos)


if __name__ == "__main__":
    key = jax.random.PRNGKey(0)
    k_table, k_ids = jax.random.split(key)

    B = 4                               # >= 2x TC count so v7x megacore is balanced
    S = MAX_SEQ_LEN                     # seq len == max_seq_len (required by broadcast)

    # nn.Embedding default init: N(0, 1)
    table = jax.random.normal(k_table, (VOCAB_SIZE, D_MODEL), dtype=jnp.float32)
    pos = jnp.asarray(get_pos_embedding(S, D_MODEL))
    ids = jax.random.randint(k_ids, (B, S), 0, VOCAB_SIZE, dtype=jnp.int32)

    out = input_embedding(ids, table, pos)
    out = jax.block_until_ready(out)

    # Reference (plain JAX): pos + table[ids]
    ref = pos[None, :, :] + jnp.take(table, ids, axis=0)
    assert out.shape == (B, S, D_MODEL)
    np.testing.assert_allclose(np.asarray(out), np.asarray(ref), rtol=1e-5, atol=1e-5)

    print("KERNEL_OK")
</pallas_src>

<mosaic_0001>
module attributes {stable_mosaic.version = 11 : i64} {
  func.func @_input_embedding_kernel(%arg0: i32, %arg1: memref<1x16x1xi32, #tpu.memory_space<vmem>>, %arg2: memref<32x128xf32, #tpu.memory_space<vmem>>, %arg3: memref<16x128xf32, #tpu.memory_space<vmem>>, %arg4: memref<1x16x128xf32, #tpu.memory_space<vmem>>) attributes {dimension_semantics = [#tpu.dimension_semantics<parallel>], iteration_bounds = array<i64: 4>, scalar_prefetch = 0 : i64, scratch_operands = 0 : i64, tpu.core_type = #tpu.core_type<tc>, window_params = [{transform_indices = @transform_0, window_bounds = array<i64: 1, 16, 1>}, {pipeline_mode = #tpu.pipeline_mode<synchronous>, transform_indices = @transform_1, window_bounds = array<i64: 32, 128>}, {pipeline_mode = #tpu.pipeline_mode<synchronous>, transform_indices = @transform_2, window_bounds = array<i64: 16, 128>}, {transform_indices = @transform_3, window_bounds = array<i64: 1, 16, 128>}]} {
    %c0 = arith.constant 0 : index
    %c0_0 = arith.constant 0 : index
    %c0_1 = arith.constant 0 : index
    %0 = vector.load %arg1[%c0, %c0_0, %c0_1] : memref<1x16x1xi32, #tpu.memory_space<vmem>>, vector<1x16x1xi32>
    %1 = vector.shape_cast %0 : vector<1x16x1xi32> to vector<16x1xi32>
    %2 = tpu.iota {dimensions = array<i32: 1>} : vector<16x32xi32>
    %3 = vector.broadcast %1 : vector<16x1xi32> to vector<16x32xi32>
    %4 = arith.cmpi eq, %3, %2 : vector<16x32xi32>
    %5 = arith.extui %4 : vector<16x32xi1> to vector<16x32xi32>
    %6 = arith.sitofp %5 : vector<16x32xi32> to vector<16x32xf32>
    %c0_2 = arith.constant 0 : index
    %c0_3 = arith.constant 0 : index
    %7 = vector.load %arg2[%c0_2, %c0_3] : memref<32x128xf32, #tpu.memory_space<vmem>>, vector<32x128xf32>
    %cst = arith.constant dense<0.000000e+00> : vector<16x128xf32>
    %8 = tpu.matmul %6, %7, %cst {dimension_numbers = #tpu.dot_dimension_numbers<[1], [0], [0], [1], [0, 0, 1, 1], [], []>} : vector<16x32xf32>, vector<32x128xf32>, vector<16x128xf32> -> vector<16x128xf32>
    %c0_4 = arith.constant 0 : index
    %c0_5 = arith.constant 0 : index
    %9 = vector.load %arg3[%c0_4, %c0_5] : memref<16x128xf32, #tpu.memory_space<vmem>>, vector<16x128xf32>
    %10 = arith.addf %8, %9 : vector<16x128xf32>
    %c0_6 = arith.constant 0 : index
    %c0_7 = arith.constant 0 : index
    %c0_8 = arith.constant 0 : index
    %11 = vector.load %arg4[%c0_6, %c0_7, %c0_8] : memref<1x16x128xf32, #tpu.memory_space<vmem>>, vector<1x16x128xf32>
    %12 = vector.shape_cast %11 : vector<1x16x128xf32> to vector<16x128xf32>
    %13 = vector.shape_cast %10 : vector<16x128xf32> to vector<1x16x128xf32>
    tpu.vector_store %arg4[%c0_6, %c0_7, %c0_8], %13 {strides = array<i32>} : memref<1x16x128xf32, #tpu.memory_space<vmem>>, vector<1x16x128xf32>,
    return
  }
  func.func @transform_0(%arg0: i32) -> (i32, i32, i32) {
    %c0_i32 = arith.constant 0 : i32
    %c0_i32_0 = arith.constant 0 : i32
    %c0_i32_1 = arith.constant 0 : i32
    return %arg0, %c0_i32, %c0_i32_0 : i32, i32, i32
  }
  func.func @transform_1(%arg0: i32) -> (i32, i32) {
    %c0_i32 = arith.constant 0 : i32
    %c0_i32_0 = arith.constant 0 : i32
    %c0_i32_1 = arith.constant 0 : i32
    return %c0_i32, %c0_i32_0 : i32, i32
  }
  func.func @transform_2(%arg0: i32) -> (i32, i32) {
    %c0_i32 = arith.constant 0 : i32
    %c0_i32_0 = arith.constant 0 : i32
    %c0_i32_1 = arith.constant 0 : i32
    return %c0_i32, %c0_i32_0 : i32, i32
  }
  func.func @transform_3(%arg0: i32) -> (i32, i32, i32) {
    %c0_i32 = arith.constant 0 : i32
    %c0_i32_0 = arith.constant 0 : i32
    %c0_i32_1 = arith.constant 0 : i32
    return %arg0, %c0_i32, %c0_i32_0 : i32, i32, i32
  }
}

</mosaic_0001>

<llo_original>
// kernel: tpu_custom_call.1
$region0: #{tpu_custom_call.1}
  #allocation0 [shape = 'u32[]', space=smem, size = 0x4, offset = 0x4, fixed_abs, tag = 'smem constant byte address 0x4 - core index']
  #allocation1 [shape = 'u32[144,128]{1,0:T(1,128)}', space=vmem, size = 0x12000, scoped, tag = 'internal scratch']
  %s0 = inlined_call_operand.vmem [shape: s32[4,16,1], index: 0, kind: input, shape index: {}]
  %s1 = inlined_call_operand.vmem [shape: f32[32,128], index: 1, kind: input, shape index: {}]
  %s2 = inlined_call_operand.vmem [shape: f32[16,128], index: 2, kind: input, shape index: {}]
  %s3 = inlined_call_operand.hbm [shape: f32[4,16,128], index: 3, kind: output, shape index: {}]
  %s4 = sld [smem:[#allocation0]]
  $region45: #{tpu_custom_call.1} parent=0
    _
  %s6 = ssub.s32 1, %s4
  %s7 = scalar_select 0, %s6, %s4
  $region1: #{tpu_custom_call.1} parent=0
    #allocation2 [shape = 'u8[16384]{0}', space=vmem, size = 0x4000, scoped, tag = 'output window, operand 0']
    #allocation3 [shape = 's32[2]{0}', space=sflag, size = 0x8, scoped, tag = 'scoped memory for tpu_custom_call.1']
    %8 = vsyncpa [#allocation3], 0
    %s9 = scalar_lea.sflag [#allocation3], 1
    %10 = vsyncpa %s9, 0
    loop: start=0, step=1, limit=6
    $region2: #{tpu_custom_call.1} parent=1 // loop_pre_header
      _
    $region3: #{tpu_custom_call.1} parent=1 // loop_header
      %s12 = sphi 0, %s16
      %p13 = scmp.ge.s32.totalorder %s12, 6
      %s22 = sphi 0, %s24
      %s25 = sphi 0, %s22
      %s26 = sphi 0, %s25
      %s42 = sphi 0, %s26
      %s46 = sphi 0, %s46
      %s48 = sphi 0, %s46
      %s49 = sphi 0, %s48
      %s63 = sphi 0, %s49
      %s67 = sphi 0, %s67
      %s69 = sphi 0, %s67
      %s70 = sphi 0, %s69
      %s84 = sphi 0, %s70
      %s90 = sphi 0, %s92
      %s93 = sphi 0, %s90
      %s94 = sphi 0, %s93
      %s110 = sphi 0, %s94
    $region4: #{tpu_custom_call.1} parent=1 // loop_header_branch
      %15 = sbr.rel (%p13) target = $region8
    $region5: #{tpu_custom_call.1} parent=1 // loop_body
      %s17 = ssub.s32 %s12, 1
      %s18 = ssub.s32 %s12, 2
      %s19 = sadd.s32 %s12, 1
      %s20 = ssub.s32 %s12, %s19
      %p21 = scmp.eq.s32.totalorder %s20, 0
      %s23 = sadd.s32 %s22, 1
      %s24 = scalar_select %p21, %s22, %s23
      %p27 = pneg %p21
      %p28 = scmp.eq.s32.totalorder %s12, 3
      %p29 = por %p27, %p28
      %p30 = scmp.ne.s32.totalorder %s22, %s25
      %p31 = scmp.eq.s32.totalorder %s12, 0
      %p32 = por %p30, %p31
      %p33 = scmp.ne.s32.totalorder %s22, %s25
      %p34 = scmp.eq.s32.totalorder %s17, 3
      %p35 = por %p33, %p34
      %p36 = scmp.ne.s32.totalorder %s25, %s26
      %p37 = scmp.eq.s32.totalorder %s17, 0
      %p38 = por %p36, %p37
      %p39 = scmp.ne.s32.totalorder %s25, %s26
      %p40 = scmp.eq.s32.totalorder %s18, 3
      %p41 = por %p39, %p40
      %p43 = scmp.ne.s32.totalorder %s26, %s42
      %p44 = scmp.eq.s32.totalorder %s18, 0
      %p45 = por %p43, %p44
      %s47 = sadd.s32 %s46, 1
      %p50 = scmp.eq.s32.totalorder %s12, 3
      %p51 = scmp.ne.s32.totalorder %s46, %s48
      %p52 = scmp.eq.s32.totalorder %s12, 0
      %p53 = por %p51, %p52
      %p54 = scmp.ne.s32.totalorder %s46, %s48
      %p55 = scmp.eq.s32.totalorder %s17, 3
      %p56 = por %p54, %p55
      %p57 = scmp.ne.s32.totalorder %s48, %s49
      %p58 = scmp.eq.s32.totalorder %s17, 0
      %p59 = por %p57, %p58
      %p60 = scmp.ne.s32.totalorder %s48, %s49
      %p61 = scmp.eq.s32.totalorder %s18, 3
      %p62 = por %p60, %p61
      %p64 = scmp.ne.s32.totalorder %s49, %s63
      %p65 = scmp.eq.s32.totalorder %s18, 0
      %p66 = por %p64, %p65
      %s68 = sadd.s32 %s67, 1
      %p71 = scmp.eq.s32.totalorder %s12, 3
      %p72 = scmp.ne.s32.totalorder %s67, %s69
      %p73 = scmp.eq.s32.totalorder %s12, 0
      %p74 = por %p72, %p73
      %p75 = scmp.ne.s32.totalorder %s67, %s69
      %p76 = scmp.eq.s32.totalorder %s17, 3
      %p77 = por %p75, %p76
      %p78 = scmp.ne.s32.totalorder %s69, %s70
      %p79 = scmp.eq.s32.totalorder %s17, 0
      %p80 = por %p78, %p79
      %p81 = scmp.ne.s32.totalorder %s69, %s70
      %p82 = scmp.eq.s32.totalorder %s18, 3
      %p83 = por %p81, %p82
      %p85 = scmp.ne.s32.totalorder %s70, %s84
      %p86 = scmp.eq.s32.totalorder %s18, 0
      %p87 = por %p85, %p86
      %s88 = ssub.s32 %s12, %s19
      %p89 = scmp.eq.s32.totalorder %s88, 0
      %s91 = sadd.s32 %s90, 1
      %s92 = scalar_select %p89, %s90, %s91
      %p95 = pneg %p89
      %p96 = scmp.eq.s32.totalorder %s12, 3
      %p97 = por %p95, %p96
      %p98 = scmp.ne.s32.totalorder %s90, %s93
      %p99 = scmp.eq.s32.totalorder %s12, 0
      %p100 = por %p98, %p99
      %p101 = scmp.ne.s32.totalorder %s90, %s93
      %p102 = scmp.eq.s32.totalorder %s17, 3
      %p103 = por %p101, %p102
      %p104 = scmp.ne.s32.totalorder %s93, %s94
      %p105 = scmp.eq.s32.totalorder %s17, 0
      %p106 = por %p104, %p105
      %p107 = scmp.ne.s32.totalorder %s93, %s94
      %p108 = scmp.eq.s32.totalorder %s18, 3
      %p109 = por %p107, %p108
      %p111 = scmp.ne.s32.totalorder %s94, %s110
      %p112 = scmp.eq.s32.totalorder %s18, 0
      %p113 = por %p111, %p112
      %p114 = scmp.le.s32.totalorder 1, %s12
      %p115 = scmp.lt.s32.totalorder %s12, 5
      %p116 = pnand %p114, %p115
      %p117 = pneg %p116
      // Predicated region
      $region9: #{tpu_custom_call.1} parent=5 // pred_check
        _
      $region10: #{tpu_custom_call.1} parent=5 // pred_check_branch
        %119 = sbr.rel (%p116) target = $region12
      $region11: #{tpu_custom_call.1} parent=5 // pred_region
        %s120 = ssub.s32 %s12, 1
        // Predicated region
        $region13: #{tpu_custom_call.1} parent=11 // pred_check
          %p121 = pneg %p59
        $region14: #{tpu_custom_call.1} parent=11 // pred_check_branch
          %123 = sbr.rel (%p121) target = $region16
        $region15: #{tpu_custom_call.1} parent=11 // pred_region
          _
        $region16: #{tpu_custom_call.1} parent=11 // pred_fallthru
          _
        // Predicated region
        $region17: #{tpu_custom_call.1} parent=11 // pred_check
          %p124 = pneg %p80
        $region18: #{tpu_custom_call.1} parent=11 // pred_check_branch
          %126 = sbr.rel (%p124) target = $region20
        $region19: #{tpu_custom_call.1} parent=11 // pred_region
          _
        $region20: #{tpu_custom_call.1} parent=11 // pred_fallthru
          _
      $region12: #{tpu_custom_call.1} parent=5 // pred_fallthru
        _
      %p127 = scmp.lt.s32.totalorder %s12, 4
      // Predicated region
      $region21: #{tpu_custom_call.1} parent=5 // pred_check
        %p128 = pneg %p127
      $region22: #{tpu_custom_call.1} parent=5 // pred_check_branch
        %130 = sbr.rel (%p128) target = $region24
      $region23: #{tpu_custom_call.1} parent=5 // pred_region
        // Predicated region
        $region25: #{tpu_custom_call.1} parent=23 // pred_check
          %p131 = pneg %p32
        $region26: #{tpu_custom_call.1} parent=23 // pred_check_branch
          %133 = sbr.rel (%p131) target = $region28
        $region27: #{tpu_custom_call.1} parent=23 // pred_region
          %p134 = scmp.lt.s32.totalorder %s12, 3
          %s135 = scalar_select %p134, %s12, 3
          %s136 = smul.addr %s135, 2
          %s137 = smul.addr %s136, 8
          %s138 = scalar_lea.vmem %s0, %s137
        $region28: #{tpu_custom_call.1} parent=23 // pred_fallthru
          _
      $region24: #{tpu_custom_call.1} parent=5 // pred_fallthru
        _
      %p139 = scmp.le.s32.totalorder 1, %s12
      %p140 = scmp.lt.s32.totalorder %s12, 5
      %p141 = pnand %p139, %p140
      %p142 = pneg %p141
      // Predicated region
      $region29: #{tpu_custom_call.1} parent=5 // pred_check
        _
      $region30: #{tpu_custom_call.1} parent=5 // pred_check_branch
        %144 = sbr.rel (%p141) target = $region32
      $region31: #{tpu_custom_call.1} parent=5 // pred_region
        %s145 = ssub.s32 %s12, 1
        %p146 = scmp.lt.s32.totalorder %s17, 3
        %s147 = scalar_select %p146, %s17, 3
        %s148 = smul.addr %s147, 2
        %s149 = smul.addr %s148, 8
        %s150 = scalar_lea.vmem %s0, %s149
        %p151 = pneg %p38
        %p152 = pneg %p35
        %p153 = pneg %p59
        %p154 = pneg %p56
        %p155 = pneg %p80
        %p156 = pneg %p77
        %p157 = pneg %p106
        %p158 = pneg %p103
        %s159 = sand.u32 %s93, 1
        %s160 = scalar_lea.sflag [#allocation3], %s159
        %s161 = sand.u32 %s93, 1
        %s162 = smul.addr %s161, 16
        %s163 = scalar_lea.vmem [#allocation2], %s162
        %p164 = scmp.lt.s32.totalorder %s17, 3
        %s165 = scalar_select %p164, %s17, 3
        %s166 = smul.addr %s165, 2
        %s167 = smul.addr %s166, 8
        %s168 = scalar_lea.vmem %s0, %s167
        %v169 = vld [vmem:[%s168] sm:$0xff]
        %v170 = vld [vmem:[%s168 + $0x8] sm:$0xff]
        %v171 = vlaneseq
        %v172 = vand.u32 %v171, 127
        %173 = vset.pattern.permute.xlu0 0
        %174 = vperm.xlu0 %173, %v169
        %v175 = vpop.permute.xlu0 %174
        %176 = vset.pattern.permute.xlu0 0
        %177 = vperm.xlu0 %176, %v170
        %v178 = vpop.permute.xlu0 %177
        %vm179 = vcmp.eq.s32.totalorder %v175, %v172
        %vm180 = vcmp.eq.s32.totalorder %v178, %v172
        %v181 = vsel %vm179, 1, 0
        %v182 = vsel %vm180, 1, 0
        %v183 = vcvt.s32.f32 %v181
        %v184 = vcvt.s32.f32 %v182
        %v185 = vld [vmem:[%s1] sm:$0xff]
        %v186 = vld [vmem:[%s1 + $0x8] sm:$0xff]
        %v187 = vld [vmem:[%s1 + $0x10] sm:$0xff]
        %v188 = vld [vmem:[%s1 + $0x18] sm:$0xff]
        %v189 = vld [vmem:[%s2] sm:$0xff]
        %v190 = vld [vmem:[%s2 + $0x8] sm:$0xff]
        %vm191 = vcmask 261120
        %v193 = vsel %vm191, %v183, 0
        %v196 = vsel %vm191, %v184, 0
        %198 = vmatprep.subr.mxu0 0.0
        %199 = vmatpush1.msra.mxu0 %v185
        %200 = vmatprep.subr.mxu0 0.0
        %201 = vmatpush1.msra.mxu0 %v186
        %202 = vmatprep.subr.mxu0 0.0
        %203 = vmatpush1.msra.mxu0 %v187
        %204 = vmatprep.subr.mxu0 0.0
        %205 = vmatpush1.msra.mxu0 %v188
        %206 = vmatprep.subr.mxu0 0.0
        %207 = vmatpush1.msra.mxu0 0.0
        %208 = vmatprep.subr.mxu0 0.0
        %209 = vmatpush1.msra.mxu0 0.0
        %210 = vmatprep.subr.mxu0 0.0
        %211 = vmatpush1.msra.mxu0 0.0
        %212 = vmatprep.subr.mxu0 0.0
        %213 = vmatpush1.msra.mxu0 0.0
        %214 = vmatprep.subr.mxu0 0.0
        %215 = vmatpush1.msra.mxu0 0.0
        %216 = vmatprep.subr.mxu0 0.0
        %217 = vmatpush1.msra.mxu0 0.0
        %218 = vmatprep.subr.mxu0 0.0
        %219 = vmatpush1.msra.mxu0 0.0
        %220 = vmatprep.subr.mxu0 0.0
        %221 = vmatpush1.msra.mxu0 0.0
        %222 = vmatprep.subr.mxu0 0.0
        %223 = vmatpush1.msra.mxu0 0.0
        %224 = vmatprep.subr.mxu0 0.0
        %225 = vmatpush1.msra.mxu0 0.0
        %226 = vmatprep.subr.mxu0 0.0
        %227 = vmatpush1.msra.mxu0 0.0
        %228 = vmatprep.subr.mxu0 0.0
        %229 = vmatpush1.msra.mxu0 0.0
        %230 = vmatprep.subr.mxu0 0.0
        %231 = vmatpush1.msra.mxu0 0.0
        %232 = vmatprep.subr.mxu0 0.0
        %233 = vmatpush1.msra.mxu0 0.0
        %234 = vmatprep.subr.mxu0 0.0
        %235 = vmatpush1.msra.mxu0 0.0
        %236 = vmatprep.subr.mxu0 0.0
        %237 = vmatpush1.msra.mxu0 0.0
        %238 = vmatprep.subr.mxu0 0.0
        %239 = vmatpush1.msra.mxu0 0.0
        %240 = vmatprep.subr.mxu0 0.0
        %241 = vmatpush1.msra.mxu0 0.0
        %242 = vmatprep.subr.mxu0 0.0
        %243 = vmatpush1.msra.mxu0 0.0
        %244 = vmatprep.subr.mxu0 0.0
        %245 = vmatpush1.msra.mxu0 0.0
        %246 = vmatprep.subr.mxu0 0.0
        %247 = vmatpush1.msra.mxu0 0.0
        %248 = vmatprep.subr.mxu0 0.0
        %249 = vmatpush1.msra.mxu0 0.0
        %250 = vmatprep.subr.mxu0 0.0
        %251 = vmatpush1.msra.mxu0 0.0
        %252 = vmatprep.subr.mxu0 0.0
        %253 = vmatpush1.msra.mxu0 0.0
        %254 = vmatprep.subr.mxu0 0.0
        %255 = vmatpush1.msra.mxu0 0.0
        %256 = vmatprep.subr.mxu0 0.0
        %257 = vmatpush1.msra.mxu0 0.0
        %258 = vmatprep.subr.mxu0 0.0
        %259 = vmatpush1.msra.mxu0 0.0
        %260 = vmatprep.subr.mxu0 0.0
        %261 = vmatpush1.msra.mxu0 0.0
        %262 = vmatprep.mubr.f32.mxu0 0.0
        %263 = vmatmul.mubr.f32.gmra.mrb[0].mxu0 %v193
        %v264 = vpop.f32.mrb[0].mxu0
        %v265 = vadd.f32 %v189, %v264
        %v266 = vpop.f32.mrb[0].mxu0
        %267 = vmatprep.mubr.f32.mxu0 0.0
        %268 = vmatmul.mubr.f32.gmra.mrb[0].mxu0 %v196
        %v269 = vpop.f32.mrb[0].mxu0
        %v270 = vadd.f32 %v190, %v269
        %v271 = vpop.f32.mrb[0].mxu0
        %272 = vdwg.mxu0
        %273 = vst [vmem:[%s163] sm:$0xff] %v265
        %274 = vst [vmem:[%s163 + $0x8] sm:$0xff] %v270
        %s275 = sand.u32 %s93, 1
        %s276 = scalar_lea.sflag [#allocation3], %s275
        %s277 = sand.u32 %s93, 1
        %s278 = smul.addr %s277, 16
        %s279 = scalar_lea.vmem [#allocation2], %s278
        // Predicated region
        $region33: #{tpu_custom_call.1} parent=31 // pred_check
          %p280 = pneg %p103
        $region34: #{tpu_custom_call.1} parent=31 // pred_check_branch
          %282 = sbr.rel (%p280) target = $region36
        $region35: #{tpu_custom_call.1} parent=31 // pred_region
          %s284 = ssub.s32 256, 256
          %285 = vsyncadd %s276, %s284
          %s286 = smul.addr %s17, 2
          %s287 = smul.addr %s286, 128
          %s288 = scalar_lea.hbm %s3, %s287
          %s289 = sshll.u32 %s279, 4
          %s290 = int_to_ptr.vmem [resolvable:$true] %s289
          %295 = dma.vmem_to_hbm [thread:$0]  %s290, 256, %s288, %s276, 128, 128, 8
        $region36: #{tpu_custom_call.1} parent=31 // pred_fallthru
          _
      $region32: #{tpu_custom_call.1} parent=5 // pred_fallthru
        _
      %p296 = scmp.le.s32.totalorder 2, %s12
      // Predicated region
      $region37: #{tpu_custom_call.1} parent=5 // pred_check
        %p297 = pneg %p296
      $region38: #{tpu_custom_call.1} parent=5 // pred_check_branch
        %299 = sbr.rel (%p297) target = $region40
      $region39: #{tpu_custom_call.1} parent=5 // pred_region
        %s300 = ssub.s32 %s12, 2
        // Predicated region
        $region41: #{tpu_custom_call.1} parent=39 // pred_check
          %p301 = pneg %p109
        $region42: #{tpu_custom_call.1} parent=39 // pred_check_branch
          %303 = sbr.rel (%p301) target = $region44
        $region43: #{tpu_custom_call.1} parent=39 // pred_region
          %s304 = sand.u32 %s94, 1
          %s305 = scalar_lea.sflag [#allocation3], %s304
          %s306 = sand.u32 %s94, 1
          %s307 = smul.addr %s306, 16
          %s308 = scalar_lea.vmem [#allocation2], %s307
          %309 = dma.done %s305, 256
        $region44: #{tpu_custom_call.1} parent=39 // pred_fallthru
          _
      $region40: #{tpu_custom_call.1} parent=5 // pred_fallthru
        _
    $region6: #{tpu_custom_call.1} parent=1 // loop_footer
      %s16 = sadd.s32 1, %s12
    $region7: #{tpu_custom_call.1} parent=1 // loop_footer_branch
      %11 = sbr.rel target = $region3
    $region8: #{tpu_custom_call.1} parent=1 // loop_exit
      _
    %310 = vsyncpa [#allocation3], 1
    %s311 = scalar_lea.sflag [#allocation3], 1
    %312 = vsyncpa %s311, 1

</llo_original>
